<compile_context>
chip_gen: v7x
topology: tpu7x:2x2x1
jax: 0.10.0
libtpu: 0.0.40
codegen_flags: <defaults>
</compile_context>

<pallas_src>
import functools

import jax
import jax.numpy as jnp
from jax import lax
from jax.experimental import pallas as pl
from jax.experimental.pallas import tpu as pltpu


def _round_up(x, m):
    return (x + m - 1) // m * m


def residual_ln_kernel(x_ref, gamma_ref, beta_ref, w_ref, b_ref, o_ref, *, eps, d_true):
    """One (tile_m, Dp) row tile: out = x + Linear(LayerNorm(x)); dropout = eval identity."""
    x = x_ref[...].astype(jnp.float32)
    dp = x.shape[-1]

    # --- LayerNorm (torch semantics: unbiased (D-1) variance, eps added to std) ---
    mean = jnp.sum(x, axis=-1, keepdims=True) * (1.0 / d_true)
    centered = x - mean
    if d_true != dp:
        # Padded columns are zero for valid rows; force them to exactly zero so
        # they do not pollute the variance (gamma/beta/W/bias are zero-padded).
        col_mask = lax.broadcasted_iota(jnp.int32, (1, dp), 1) < d_true
        centered = jnp.where(col_mask, centered, 0.0)
    denom = max(d_true - 1, 1)  # guard d_model == 1 (torch would produce nan)
    var_unbiased = jnp.sum(centered * centered, axis=-1, keepdims=True) * (1.0 / denom)
    inv = pl.reciprocal(jnp.sqrt(var_unbiased) + eps, approx=False)
    normed = (gamma_ref[...] * centered * inv + beta_ref[...]).astype(jnp.bfloat16)

    # --- sublayer: Linear(d_model, d_model) on the MXU, bf16 in / f32 accumulate ---
    y = jnp.dot(normed, w_ref[...], preferred_element_type=jnp.float32) + b_ref[...]

    # --- dropout (eval mode: identity) + residual; store in the input dtype ---
    # Re-read x_ref instead of keeping the f32 cast live across the matmul:
    # fewer live full-tile f32 temporaries -> more tile_m headroom on v7x.
    o_ref[...] = (x_ref[...].astype(jnp.float32) + y).astype(o_ref.dtype)


def _choose_tile_m(Dp, x_bytes, out_bytes, vmem_budget):
    """Largest MXU-friendly row tile that fits the per-core VMEM budget."""
    # Resident (single-buffered) constants: bf16 W + three f32 (1, Dp) vectors.
    resident = Dp * Dp * 2 + 3 * Dp * 4
    # Per-row bytes: double-buffered x tile + double-buffered out tile +
    # ~3 f32 full-tile temporaries inside the body (conservative).
    per_row = Dp * (2 * x_bytes + 2 * out_bytes + 3 * 4)
    avail = max(vmem_budget - resident, 8 * per_row)
    t = int(avail // per_row)
    if t >= 256:
        t = (t // 256) * 256      # align with the 256x256 MXU (v6e/v7x)
    elif t >= 128:
        t = 128
    else:
        t = max((t // 8) * 8, 8)
    return min(t, 1024)           # >1024 rows stops paying back per-step overhead


def residual_connection(x, gamma, beta, w, b, *, eps=1e-6, tile_m=None):
    """x: (B, S, D). Returns (B, S, D) in x.dtype = x + Linear(LayerNorm(x))."""
    B, S, D = x.shape
    M = B * S
    x_bytes = jnp.dtype(x.dtype).itemsize
    out_bytes = x_bytes  # output matches the input dtype

    # Lane-dense last dim. When D is already a multiple of 128 (typical d_model)
    # there is NO wrapper-side pad/slice of the big tensor at all.
    Dp = _round_up(D, 128)
    pad_d = Dp != D
    # NOTE: D < 128 (e.g. the toy d_model=32 case) pays 4x padding bandwidth;
    # acceptable only because such shapes are tiny.

    x2 = x.reshape(M, D)
    if pad_d:
        x2 = jnp.pad(x2, ((0, 0), (0, Dp - D)))
    gamma2 = jnp.pad(gamma.reshape(1, D).astype(jnp.float32), ((0, 0), (0, Dp - D)))
    beta2 = jnp.pad(beta.reshape(1, D).astype(jnp.float32), ((0, 0), (0, Dp - D)))
    b2 = jnp.pad(b.reshape(1, D).astype(jnp.float32), ((0, 0), (0, Dp - D)))
    # W in bf16: MXU-rate matmul and half the resident VMEM footprint.
    w2 = jnp.pad(w.astype(jnp.bfloat16), ((0, Dp - D), (0, Dp - D)))

    # Generation-aware VMEM budget: ~85% of per-core capacity (~54 MiB v7x,
    # ~109 MiB v5e/v6e). Fall back to a v7x-safe figure if the query fails.
    try:
        vmem_cap = int(pltpu.get_tpu_info().vmem_capacity_bytes)
    except Exception:
        vmem_cap = 64 << 20
    vmem_budget = int(vmem_cap * 0.85)

    def _clamp_rows(t):
        if M % 8 == 0:
            t_max = M
        elif M > 8:
            t_max = (M // 8) * 8   # ragged remainder handled by the cdiv grid
        else:
            t_max = M              # block == full first dim (allowed)
        if t_max < 8:
            return t_max
        return min(max((t // 8) * 8, 8), t_max)

    if tile_m is None:
        tile_m = _choose_tile_m(Dp, x_bytes, out_bytes, vmem_budget)
    tile_m = _clamp_rows(int(tile_m))

    grid = (pl.cdiv(M, tile_m),)   # ragged M: Pallas masks the partial last block
    kernel = functools.partial(residual_ln_kernel, eps=eps, d_true=D)

    def _run(single_buffer_consts):
        if single_buffer_consts:
            const_spec = lambda shape: pl.BlockSpec(
                shape, lambda i: (0, 0), pipeline_mode=pl.Buffered(1))
        else:
            const_spec = lambda shape: pl.BlockSpec(shape, lambda i: (0, 0))
        return pl.pallas_call(
            kernel,
            out_shape=jax.ShapeDtypeStruct((M, Dp), x.dtype),
            grid_spec=pltpu.PrefetchScalarGridSpec(
                num_scalar_prefetch=0,
                grid=grid,
                in_specs=[
                    pl.BlockSpec((tile_m, Dp), lambda i: (i, 0)),  # x: streamed tiles
                    const_spec((1, Dp)),    # gamma: resident
                    const_spec((1, Dp)),    # beta:  resident
                    const_spec((Dp, Dp)),   # W (bf16): resident
                    const_spec((1, Dp)),    # bias:  resident
                ],
                out_specs=pl.BlockSpec((tile_m, Dp), lambda i: (i, 0)),
            ),
            compiler_params=pltpu.CompilerParams(
                dimension_semantics=("parallel",),  # independent row tiles -> megacore
                vmem_limit_bytes=vmem_budget,
            ),
        )(x2, gamma2, beta2, w2, b2)

    try:
        out = _run(True)
    except Exception:
        # TODO(synk): drop this fallback once pipeline_mode=pl.Buffered(1)
        # single-buffering is confirmed on the deployed jax version.
        out = _run(False)

    if pad_d:
        out = out[:, :D]
    return out.reshape(B, S, D)


def _reference(x, gamma, beta, w, b, eps=1e-6):
    xf = x.astype(jnp.float32)
    mean = jnp.mean(xf, axis=-1, keepdims=True)
    var = jnp.sum((xf - mean) ** 2, axis=-1, keepdims=True) / max(x.shape[-1] - 1, 1)
    std = jnp.sqrt(var)
    normed = (gamma.astype(jnp.float32) * (xf - mean) / (std + eps)
              + beta.astype(jnp.float32))
    y = normed @ w.astype(jnp.float32) + b.astype(jnp.float32)
    return xf + y


def _make_inputs(key, B, S, D, dtype):
    kx, kw, kb = jax.random.split(key, 3)
    x = jax.random.normal(kx, (B, S, D), dtype=jnp.float32).astype(dtype)
    gamma = jnp.ones((D,), dtype=jnp.float32)   # LayerNorm.gamma
    beta = jnp.zeros((D,), dtype=jnp.float32)   # LayerNorm.beta
    w = jax.random.normal(kw, (D, D), dtype=jnp.float32) * 0.02
    b = jax.random.normal(kb, (D,), dtype=jnp.float32) * 0.02
    return x, gamma, beta, w, b


if __name__ == "__main__":
    # Case 1: module-scale toy shape (batch=2, seq=8, d_model=32) -> D<128 pad path.
    x, gamma, beta, w, b = _make_inputs(jax.random.PRNGKey(0), 2, 8, 32, jnp.float32)
    out = jax.block_until_ready(residual_connection(x, gamma, beta, w, b))
    ref = _reference(x, gamma, beta, w, b)
    assert out.shape == x.shape and out.dtype == x.dtype
    # Tolerance covers the deliberate bf16 MXU operands (f32 accumulation).
    assert jnp.allclose(out, ref, atol=1e-2, rtol=1e-2), "mismatch vs reference (case 1)"

    # Case 2: d_model % 128 == 0 (no wrapper pad/slice) with a multi-step grid and
    # a ragged final row block (M = 520, tile_m = 256 -> 3 steps, last one partial).
    x, gamma, beta, w, b = _make_inputs(jax.random.PRNGKey(1), 2, 260, 128, jnp.float32)
    out = jax.block_until_ready(residual_connection(x, gamma, beta, w, b, tile_m=256))
    ref = _reference(x, gamma, beta, w, b)
    assert out.shape == x.shape and out.dtype == x.dtype
    assert jnp.allclose(out, ref, atol=1e-2, rtol=1e-2), "mismatch vs reference (case 2)"

    # Case 3: bf16 activations -> output stays bf16 (halved writeback bytes).
    x, gamma, beta, w, b = _make_inputs(jax.random.PRNGKey(2), 2, 8, 32, jnp.bfloat16)
    out = jax.block_until_ready(residual_connection(x, gamma, beta, w, b))
    ref = _reference(x, gamma, beta, w, b)
    assert out.shape == x.shape and out.dtype == jnp.bfloat16
    assert jnp.allclose(out.astype(jnp.float32), ref, atol=5e-2, rtol=5e-2), \
        "mismatch vs reference (case 3)"

    print("KERNEL_OK")
</pallas_src>

<mosaic_0001>
module attributes {stable_mosaic.version = 11 : i64} {
  func.func @residual_ln_kernel(%arg0: i32, %arg1: memref<16x128xf32, #tpu.memory_space<vmem>>, %arg2: memref<1x128xf32, #tpu.memory_space<vmem>>, %arg3: memref<1x128xf32, #tpu.memory_space<vmem>>, %arg4: memref<128x128xbf16, #tpu.memory_space<vmem>>, %arg5: memref<1x128xf32, #tpu.memory_space<vmem>>, %arg6: memref<16x128xf32, #tpu.memory_space<vmem>>) attributes {dimension_semantics = [#tpu.dimension_semantics<parallel>], iteration_bounds = array<i64: 1>, scalar_prefetch = 0 : i64, scratch_operands = 0 : i64, tpu.core_type = #tpu.core_type<tc>, window_params = [{transform_indices = @transform_0, window_bounds = array<i64: 16, 128>}, {pipeline_mode = #tpu.pipeline_mode<synchronous>, transform_indices = @transform_1, window_bounds = array<i64: 1, 128>}, {pipeline_mode = #tpu.pipeline_mode<synchronous>, transform_indices = @transform_2, window_bounds = array<i64: 1, 128>}, {pipeline_mode = #tpu.pipeline_mode<synchronous>, transform_indices = @transform_3, window_bounds = array<i64: 128, 128>}, {pipeline_mode = #tpu.pipeline_mode<synchronous>, transform_indices = @transform_4, window_bounds = array<i64: 1, 128>}, {transform_indices = @transform_5, window_bounds = array<i64: 16, 128>}]} {
    %c0 = arith.constant 0 : index
    %c0_0 = arith.constant 0 : index
    %0 = vector.load %arg1[%c0, %c0_0] : memref<16x128xf32, #tpu.memory_space<vmem>>, vector<16x128xf32>
    %cst = arith.constant dense<0.000000e+00> : vector<16xf32>
    %1 = vector.multi_reduction <add>, %0, %cst [1] : vector<16x128xf32> to vector<16xf32>
    %2 = vector.shape_cast %1 : vector<16xf32> to vector<16x1xf32>
    %cst_1 = arith.constant 3.125000e-02 : f32
    %3 = vector.broadcast %cst_1 : f32 to vector<16x1xf32>
    %4 = arith.mulf %2, %3 : vector<16x1xf32>
    %5 = vector.broadcast %4 : vector<16x1xf32> to vector<16x128xf32>
    %6 = arith.subf %0, %5 : vector<16x128xf32>
    %7 = tpu.iota {dimensions = array<i32: 1>} : vector<1x128xi32>
    %c32_i32 = arith.constant 32 : i32
    %8 = vector.broadcast %c32_i32 : i32 to vector<1x128xi32>
    %9 = arith.cmpi slt, %7, %8 : vector<1x128xi32>
    %cst_2 = arith.constant 0.000000e+00 : f32
    %10 = vector.shape_cast %9 : vector<1x128xi1> to vector<1x128xi1>
    %11 = vector.broadcast %10 : vector<1x128xi1> to vector<16x128xi1>
    %12 = vector.broadcast %cst_2 : f32 to vector<16x128xf32>
    %13 = arith.select %11, %6, %12 : vector<16x128xi1>, vector<16x128xf32>
    %14 = arith.mulf %13, %13 : vector<16x128xf32>
    %cst_3 = arith.constant dense<0.000000e+00> : vector<16xf32>
    %15 = vector.multi_reduction <add>, %14, %cst_3 [1] : vector<16x128xf32> to vector<16xf32>
    %16 = vector.shape_cast %15 : vector<16xf32> to vector<16x1xf32>
    %cst_4 = arith.constant 0.0322580636 : f32
    %17 = vector.broadcast %cst_4 : f32 to vector<16x1xf32>
    %18 = arith.mulf %16, %17 : vector<16x1xf32>
    %19 = math.sqrt %18 : vector<16x1xf32>
    %cst_5 = arith.constant 9.99999997E-7 : f32
    %20 = vector.broadcast %cst_5 : f32 to vector<16x1xf32>
    %21 = arith.addf %19, %20 : vector<16x1xf32>
    %22 = tpu.reciprocal %21 : vector<16x1xf32> -> vector<16x1xf32>
    %c0_6 = arith.constant 0 : index
    %c0_7 = arith.constant 0 : index
    %23 = vector.load %arg2[%c0_6, %c0_7] : memref<1x128xf32, #tpu.memory_space<vmem>>, vector<1x128xf32>
    %24 = vector.broadcast %23 : vector<1x128xf32> to vector<16x128xf32>
    %25 = arith.mulf %24, %13 : vector<16x128xf32>
    %26 = vector.broadcast %22 : vector<16x1xf32> to vector<16x128xf32>
    %27 = arith.mulf %25, %26 : vector<16x128xf32>
    %c0_8 = arith.constant 0 : index
    %c0_9 = arith.constant 0 : index
    %28 = vector.load %arg3[%c0_8, %c0_9] : memref<1x128xf32, #tpu.memory_space<vmem>>, vector<1x128xf32>
    %29 = vector.broadcast %28 : vector<1x128xf32> to vector<16x128xf32>
    %30 = arith.addf %27, %29 : vector<16x128xf32>
    %31 = arith.truncf %30 : vector<16x128xf32> to vector<16x128xbf16>
    %c0_10 = arith.constant 0 : index
    %c0_11 = arith.constant 0 : index
    %32 = vector.load %arg4[%c0_10, %c0_11] : memref<128x128xbf16, #tpu.memory_space<vmem>>, vector<128x128xbf16>
    %cst_12 = arith.constant dense<0.000000e+00> : vector<16x128xf32>
    %33 = tpu.matmul %31, %32, %cst_12 {dimension_numbers = #tpu.dot_dimension_numbers<[1], [0], [0], [1], [0, 0, 1, 1], [], []>} : vector<16x128xbf16>, vector<128x128xbf16>, vector<16x128xf32> -> vector<16x128xf32>
    %c0_13 = arith.constant 0 : index
    %c0_14 = arith.constant 0 : index
    %34 = vector.load %arg5[%c0_13, %c0_14] : memref<1x128xf32, #tpu.memory_space<vmem>>, vector<1x128xf32>
    %35 = vector.broadcast %34 : vector<1x128xf32> to vector<16x128xf32>
    %36 = arith.addf %33, %35 : vector<16x128xf32>
    %c0_15 = arith.constant 0 : index
    %c0_16 = arith.constant 0 : index
    %37 = vector.load %arg1[%c0_15, %c0_16] : memref<16x128xf32, #tpu.memory_space<vmem>>, vector<16x128xf32>
    %38 = arith.addf %37, %36 : vector<16x128xf32>
    %c0_17 = arith.constant 0 : index
    %c0_18 = arith.constant 0 : index
    %39 = vector.load %arg6[%c0_17, %c0_18] : memref<16x128xf32, #tpu.memory_space<vmem>>, vector<16x128xf32>
    tpu.vector_store %arg6[%c0_17, %c0_18], %38 {strides = array<i32>} : memref<16x128xf32, #tpu.memory_space<vmem>>, vector<16x128xf32>,
    return
  }
  func.func @transform_0(%arg0: i32) -> (i32, i32) {
    %c0_i32 = arith.constant 0 : i32
    %c0_i32_0 = arith.constant 0 : i32
    return %arg0, %c0_i32 : i32, i32
  }
  func.func @transform_1(%arg0: i32) -> (i32, i32) {
    %c0_i32 = arith.constant 0 : i32
    %c0_i32_0 = arith.constant 0 : i32
    %c0_i32_1 = arith.constant 0 : i32
    return %c0_i32, %c0_i32_0 : i32, i32
  }
  func.func @transform_2(%arg0: i32) -> (i32, i32) {
    %c0_i32 = arith.constant 0 : i32
    %c0_i32_0 = arith.constant 0 : i32
    %c0_i32_1 = arith.constant 0 : i32
    return %c0_i32, %c0_i32_0 : i32, i32
  }
  func.func @transform_3(%arg0: i32) -> (i32, i32) {
    %c0_i32 = arith.constant 0 : i32
    %c0_i32_0 = arith.constant 0 : i32
    %c0_i32_1 = arith.constant 0 : i32
    return %c0_i32, %c0_i32_0 : i32, i32
  }
  func.func @transform_4(%arg0: i32) -> (i32, i32) {
    %c0_i32 = arith.constant 0 : i32
    %c0_i32_0 = arith.constant 0 : i32
    %c0_i32_1 = arith.constant 0 : i32
    return %c0_i32, %c0_i32_0 : i32, i32
  }
  func.func @transform_5(%arg0: i32) -> (i32, i32) {
    %c0_i32 = arith.constant 0 : i32
    %c0_i32_0 = arith.constant 0 : i32
    return %arg0, %c0_i32 : i32, i32
  }
}

module attributes {stable_mosaic.version = 11 : i64} {
  func.func @residual_ln_kernel(%arg0: i32, %arg1: memref<16x128xf32, #tpu.memory_space<vmem>>, %arg2: memref<1x128xf32, #tpu.memory_space<vmem>>, %arg3: memref<1x128xf32, #tpu.memory_space<vmem>>, %arg4: memref<128x128xbf16, #tpu.memory_space<vmem>>, %arg5: memref<1x128xf32, #tpu.memory_space<vmem>>, %arg6: memref<16x128xf32, #tpu.memory_space<vmem>>) attributes {dimension_semantics = [#tpu.dimension_semantics<parallel>], iteration_bounds = array<i64: 1>, scalar_prefetch = 0 : i64, scratch_operands = 0 : i64, tpu.core_type = #tpu.core_type<tc>, window_params = [{transform_indices = @transform_0, window_bounds = array<i64: 16, 128>}, {pipeline_mode = #tpu.pipeline_mode<synchronous>, transform_indices = @transform_1, window_bounds = array<i64: 1, 128>}, {pipeline_mode = #tpu.pipeline_mode<synchronous>, transform_indices = @transform_2, window_bounds = array<i64: 1, 128>}, {pipeline_mode = #tpu.pipeline_mode<synchronous>, transform_indices = @transform_3, window_bounds = array<i64: 128, 128>}, {pipeline_mode = #tpu.pipeline_mode<synchronous>, transform_indices = @transform_4, window_bounds = array<i64: 1, 128>}, {transform_indices = @transform_5, window_bounds = array<i64: 16, 128>}]} {
    %c0 = arith.constant 0 : index
    %c0_0 = arith.constant 0 : index
    %0 = vector.load %arg1[%c0, %c0_0] : memref<16x128xf32, #tpu.memory_space<vmem>>, vector<16x128xf32>
    %cst = arith.constant dense<0.000000e+00> : vector<16xf32>
    %1 = vector.multi_reduction <add>, %0, %cst [1] : vector<16x128xf32> to vector<16xf32>
    %2 = vector.shape_cast %1 : vector<16xf32> to vector<16x1xf32>
    %cst_1 = arith.constant 3.125000e-02 : f32
    %3 = vector.broadcast %cst_1 : f32 to vector<16x1xf32>
    %4 = arith.mulf %2, %3 : vector<16x1xf32>
    %5 = vector.broadcast %4 : vector<16x1xf32> to vector<16x128xf32>
    %6 = arith.subf %0, %5 : vector<16x128xf32>
    %7 = tpu.iota {dimensions = array<i32: 1>} : vector<1x128xi32>
    %c32_i32 = arith.constant 32 : i32
    %8 = vector.broadcast %c32_i32 : i32 to vector<1x128xi32>
    %9 = arith.cmpi slt, %7, %8 : vector<1x128xi32>
    %cst_2 = arith.constant 0.000000e+00 : f32
    %10 = vector.shape_cast %9 : vector<1x128xi1> to vector<1x128xi1>
    %11 = vector.broadcast %10 : vector<1x128xi1> to vector<16x128xi1>
    %12 = vector.broadcast %cst_2 : f32 to vector<16x128xf32>
    %13 = arith.select %11, %6, %12 : vector<16x128xi1>, vector<16x128xf32>
    %14 = arith.mulf %13, %13 : vector<16x128xf32>
    %cst_3 = arith.constant dense<0.000000e+00> : vector<16xf32>
    %15 = vector.multi_reduction <add>, %14, %cst_3 [1] : vector<16x128xf32> to vector<16xf32>
    %16 = vector.shape_cast %15 : vector<16xf32> to vector<16x1xf32>
    %cst_4 = arith.constant 0.0322580636 : f32
    %17 = vector.broadcast %cst_4 : f32 to vector<16x1xf32>
    %18 = arith.mulf %16, %17 : vector<16x1xf32>
    %19 = math.sqrt %18 : vector<16x1xf32>
    %cst_5 = arith.constant 9.99999997E-7 : f32
    %20 = vector.broadcast %cst_5 : f32 to vector<16x1xf32>
    %21 = arith.addf %19, %20 : vector<16x1xf32>
    %22 = tpu.reciprocal %21 : vector<16x1xf32> -> vector<16x1xf32>
    %c0_6 = arith.constant 0 : index
    %c0_7 = arith.constant 0 : index
    %23 = vector.load %arg2[%c0_6, %c0_7] : memref<1x128xf32, #tpu.memory_space<vmem>>, vector<1x128xf32>
    %24 = vector.broadcast %23 : vector<1x128xf32> to vector<16x128xf32>
    %25 = arith.mulf %24, %13 : vector<16x128xf32>
    %26 = vector.broadcast %22 : vector<16x1xf32> to vector<16x128xf32>
    %27 = arith.mulf %25, %26 : vector<16x128xf32>
    %c0_8 = arith.constant 0 : index
    %c0_9 = arith.constant 0 : index
    %28 = vector.load %arg3[%c0_8, %c0_9] : memref<1x128xf32, #tpu.memory_space<vmem>>, vector<1x128xf32>
    %29 = vector.broadcast %28 : vector<1x128xf32> to vector<16x128xf32>
    %30 = arith.addf %27, %29 : vector<16x128xf32>
    %31 = arith.truncf %30 : vector<16x128xf32> to vector<16x128xbf16>
    %c0_10 = arith.constant 0 : index
    %c0_11 = arith.constant 0 : index
    %32 = vector.load %arg4[%c0_10, %c0_11] : memref<128x128xbf16, #tpu.memory_space<vmem>>, vector<128x128xbf16>
    %cst_12 = arith.constant dense<0.000000e+00> : vector<16x128xf32>
    %33 = tpu.matmul %31, %32, %cst_12 {dimension_numbers = #tpu.dot_dimension_numbers<[1], [0], [0], [1], [0, 0, 1, 1], [], []>} : vector<16x128xbf16>, vector<128x128xbf16>, vector<16x128xf32> -> vector<16x128xf32>
    %c0_13 = arith.constant 0 : index
    %c0_14 = arith.constant 0 : index
    %34 = vector.load %arg5[%c0_13, %c0_14] : memref<1x128xf32, #tpu.memory_space<vmem>>, vector<1x128xf32>
    %35 = vector.broadcast %34 : vector<1x128xf32> to vector<16x128xf32>
    %36 = arith.addf %33, %35 : vector<16x128xf32>
    %c0_15 = arith.constant 0 : index
    %c0_16 = arith.constant 0 : index
    %37 = vector.load %arg1[%c0_15, %c0_16] : memref<16x128xf32, #tpu.memory_space<vmem>>, vector<16x128xf32>
    %38 = arith.addf %37, %36 : vector<16x128xf32>
    %c0_17 = arith.constant 0 : index
    %c0_18 = arith.constant 0 : index
    %39 = vector.load %arg6[%c0_17, %c0_18] : memref<16x128xf32, #tpu.memory_space<vmem>>, vector<16x128xf32>
    tpu.vector_store %arg6[%c0_17, %c0_18], %38 {strides = array<i32>} : memref<16x128xf32, #tpu.memory_space<vmem>>, vector<16x128xf32>,
    return
  }
  func.func @transform_0(%arg0: i32) -> (i32, i32) {
    %c0_i32 = arith.constant 0 : i32
    %c0_i32_0 = arith.constant 0 : i32
    return %arg0, %c0_i32 : i32, i32
  }
  func.func @transform_1(%arg0: i32) -> (i32, i32) {
    %c0_i32 = arith.constant 0 : i32
    %c0_i32_0 = arith.constant 0 : i32
    %c0_i32_1 = arith.constant 0 : i32
    return %c0_i32, %c0_i32_0 : i32, i32
  }
  func.func @transform_2(%arg0: i32) -> (i32, i32) {
    %c0_i32 = arith.constant 0 : i32
    %c0_i32_0 = arith.constant 0 : i32
    %c0_i32_1 = arith.constant 0 : i32
    return %c0_i32, %c0_i32_0 : i32, i32
  }
  func.func @transform_3(%arg0: i32) -> (i32, i32) {
    %c0_i32 = arith.constant 0 : i32
    %c0_i32_0 = arith.constant 0 : i32
    %c0_i32_1 = arith.constant 0 : i32
    return %c0_i32, %c0_i32_0 : i32, i32
  }
  func.func @transform_4(%arg0: i32) -> (i32, i32) {
    %c0_i32 = arith.constant 0 : i32
    %c0_i32_0 = arith.constant 0 : i32
    %c0_i32_1 = arith.constant 0 : i32
    return %c0_i32, %c0_i32_0 : i32, i32
  }
  func.func @transform_5(%arg0: i32) -> (i32, i32) {
    %c0_i32 = arith.constant 0 : i32
    %c0_i32_0 = arith.constant 0 : i32
    return %arg0, %c0_i32 : i32, i32
  }
}

</mosaic_0001>

<llo_original>
// kernel: tpu_custom_call.1
$region0: #{tpu_custom_call.1}
  #allocation0 [shape = 'u32[]', space=smem, size = 0x4, offset = 0x4, fixed_abs, tag = 'smem constant byte address 0x4 - core index']
  #allocation1 [shape = 'u32[144,128]{1,0:T(1,128)}', space=vmem, size = 0x12000, scoped, tag = 'internal scratch']
  %s0 = inlined_call_operand.hbm [shape: f32[16,128], index: 0, kind: input, shape index: {}]
  %s1 = inlined_call_operand.vmem [shape: f32[1,128], index: 1, kind: input, shape index: {}]
  %s2 = inlined_call_operand.vmem [shape: f32[1,128], index: 2, kind: input, shape index: {}]
  %s3 = inlined_call_operand.hbm [shape: bf16[128,128], index: 3, kind: input, shape index: {}]
  %s4 = inlined_call_operand.vmem [shape: f32[1,128], index: 4, kind: input, shape index: {}]
  %s5 = inlined_call_operand.hbm [shape: f32[16,128], index: 5, kind: output, shape index: {}]
  %s6 = sld [smem:[#allocation0]]
  $region38: #{tpu_custom_call.1} parent=0
    _
  %s8 = ssub.s32 1, %s6
  %s9 = scalar_select 0, %s8, %s6
  $region1: #{tpu_custom_call.1} parent=0
    #allocation2 [shape = 'u8[8192]{0}', space=vmem, size = 0x2000, scoped, tag = 'input window, operand 0, single buffered']
    #allocation3 [shape = 's32[1]{0}', space=sflag, size = 0x4, scoped, tag = 'scoped memory for tpu_custom_call.1']
    #allocation4 [shape = 's32[1]{0}', space=sflag, size = 0x4, scoped, tag = 'scoped memory for tpu_custom_call.1']
    #allocation5 [shape = 'u8[32768]{0}', space=vmem, size = 0x8000, scoped, tag = 'input window, operand 3, single buffered']
    #allocation6 [shape = 's32[1]{0}', space=sflag, size = 0x4, scoped, tag = 'scoped memory for tpu_custom_call.1']
    #allocation7 [shape = 'u8[8192]{0}', space=vmem, size = 0x2000, scoped, tag = 'output window, operand 0, single buffered']
    %10 = vsyncpa [#allocation3], 0
    %11 = vsyncpa [#allocation6], 0
    %12 = vsyncpa [#allocation4], 0
    // Predicated region
    $region2: #{tpu_custom_call.1} parent=1 // pred_check
      _
    $region3: #{tpu_custom_call.1} parent=1 // pred_check_branch
      %14 = sbr.rel (0) target = $region5
    $region4: #{tpu_custom_call.1} parent=1 // pred_region
      %s16 = ssub.s32 256, 256
      %17 = vsyncadd [#allocation3], %s16
      %s18 = sshll.u32 [#allocation2], 4
      %s19 = int_to_ptr.vmem [resolvable:$true] %s18
      %24 = dma.hbm_to_vmem [thread:$0]  %s0, 256, %s19, [#allocation3], 128, 128, 8
    $region5: #{tpu_custom_call.1} parent=1 // pred_fallthru
      _
    // Predicated region
    $region6: #{tpu_custom_call.1} parent=1 // pred_check
      _
    $region7: #{tpu_custom_call.1} parent=1 // pred_check_branch
      %26 = sbr.rel (0) target = $region9
    $region8: #{tpu_custom_call.1} parent=1 // pred_region
      _
    $region9: #{tpu_custom_call.1} parent=1 // pred_fallthru
      _
    // Predicated region
    $region10: #{tpu_custom_call.1} parent=1 // pred_check
      _
    $region11: #{tpu_custom_call.1} parent=1 // pred_check_branch
      %28 = sbr.rel (0) target = $region13
    $region12: #{tpu_custom_call.1} parent=1 // pred_region
      _
    $region13: #{tpu_custom_call.1} parent=1 // pred_fallthru
      _
    // Predicated region
    $region14: #{tpu_custom_call.1} parent=1 // pred_check
      _
    $region15: #{tpu_custom_call.1} parent=1 // pred_check_branch
      %30 = sbr.rel (0) target = $region17
    $region16: #{tpu_custom_call.1} parent=1 // pred_region
      %s32 = ssub.s32 1024, 1024
      %33 = vsyncadd [#allocation6], %s32
      %s34 = sshll.u32 [#allocation5], 4
      %s35 = int_to_ptr.vmem [resolvable:$true] %s34
      %40 = dma.hbm_to_vmem [thread:$0]  %s3, 1024, %s35, [#allocation6], 64, 64, 4
    $region17: #{tpu_custom_call.1} parent=1 // pred_fallthru
      _
    // Predicated region
    $region18: #{tpu_custom_call.1} parent=1 // pred_check
      _
    $region19: #{tpu_custom_call.1} parent=1 // pred_check_branch
      %42 = sbr.rel (0) target = $region21
    $region20: #{tpu_custom_call.1} parent=1 // pred_region
      _
    $region21: #{tpu_custom_call.1} parent=1 // pred_fallthru
      _
    // Predicated region
    $region22: #{tpu_custom_call.1} parent=1 // pred_check
      _
    $region23: #{tpu_custom_call.1} parent=1 // pred_check_branch
      %44 = sbr.rel (0) target = $region25
    $region24: #{tpu_custom_call.1} parent=1 // pred_region
      %45 = dma.done [#allocation3], 256
    $region25: #{tpu_custom_call.1} parent=1 // pred_fallthru
      _
    // Predicated region
    $region26: #{tpu_custom_call.1} parent=1 // pred_check
      _
    $region27: #{tpu_custom_call.1} parent=1 // pred_check_branch
      %47 = sbr.rel (0) target = $region29
    $region28: #{tpu_custom_call.1} parent=1 // pred_region
      %48 = dma.done [#allocation6], 1024
    $region29: #{tpu_custom_call.1} parent=1 // pred_fallthru
      _
    %v50 = vld [vmem:[#allocation2] sm:$0xff]
    %v51 = vld [vmem:[#allocation2 + $0x8] sm:$0xff]
    %52 = vadd.xlane.f32.xlu0 %v50
    %v53 = vpop.xlane.xlu0 %52
    %54 = vadd.xlane.f32.xlu0 %v51
    %v55 = vpop.xlane.xlu0 %54
    %v56 = vmul.f32 %v53, 0.03125
    %v57 = vmul.f32 %v55, 0.03125
    %v58 = vsub.f32 %v50, %v56
    %v59 = vsub.f32 %v51, %v57
    %v60 = vlaneseq
    %v61 = vand.u32 %v60, 127
    %vm62 = vcmp.lt.s32.totalorder %v61, 32
    %v63 = vsel %vm62, 1, 0
    %vm64 = vcmp.eq.s32.totalorder %v63, 1
    %v65 = vsel %vm64, %v58, 0.0
    %v66 = vsel %vm64, %v59, 0.0
    %v67 = vmul.f32 %v65, %v65
    %v68 = vmul.f32 %v66, %v66
    %69 = vadd.xlane.f32.xlu0 %v67
    %v70 = vpop.xlane.xlu0 %69
    %71 = vadd.xlane.f32.xlu0 %v68
    %v72 = vpop.xlane.xlu0 %71
    %v73 = vmul.f32 %v70, 0.032258064
    %v74 = vmul.f32 %v72, 0.032258064
    %v75 = vrsqrt.pop %v73
    %v76 = vmul.f32 %v73, %v75
    %vm77 = vcmp.eq.f32.partialorder %v73, inf
    %v78 = vsel %vm77, %v73, %v76
    %vm79 = vcmp.eq.f32.partialorder %v73, 0.0
    %v80 = vand.u32 %v73, 2147483648
    %v81 = vsel %vm79, %v80, %v78
    %v82 = vrsqrt.pop %v74
    %v83 = vmul.f32 %v74, %v82
    %vm84 = vcmp.eq.f32.partialorder %v74, inf
    %v85 = vsel %vm84, %v74, %v83
    %vm86 = vcmp.eq.f32.partialorder %v74, 0.0
    %v87 = vand.u32 %v74, 2147483648
    %v88 = vsel %vm86, %v87, %v85
    %v89 = vadd.f32 %v81, 1e-06
    %v90 = vadd.f32 %v88, 1e-06
    %v91 = vrcp.pop %v89
    %v92 = vrcp.pop %v90
    %v93 = vld [vmem:[%s1] sm:$0x1]
    %v95 = vlaneseq
    %v96 = vshrl.u32 %v95, 7
    %v97 = vsub.s32 0, %v96
    %v98 = vrot.slane %v93, %v97
    %v100 = vmul.f32 %v98, %v65
    %v101 = vmul.f32 %v98, %v66
    %v102 = vmul.f32 %v100, %v91
    %v103 = vmul.f32 %v101, %v92
    %v104 = vld [vmem:[%s2] sm:$0x1]
    %v106 = vlaneseq
    %v107 = vshrl.u32 %v106, 7
    %v108 = vsub.s32 0, %v107
    %v109 = vrot.slane %v104, %v108
    %v111 = vadd.f32 %v102, %v109
    %v112 = vadd.f32 %v103, %v109
    %v113 = vpack.c.bf16 %v112, %v111
    %v114 = vld [vmem:[#allocation5] sm:$0xf]
    %v115 = vld [vmem:[#allocation5 + $0x4] sm:$0xf]
    %v116 = vld [vmem:[#allocation5 + $0x8] sm:$0xf]
    %v117 = vld [vmem:[#allocation5 + $0xc] sm:$0xf]
    %v118 = vld [vmem:[#allocation5 + $0x10] sm:$0xf]
    %v119 = vld [vmem:[#allocation5 + $0x14] sm:$0xf]
    %v120 = vld [vmem:[#allocation5 + $0x18] sm:$0xf]
    %v121 = vld [vmem:[#allocation5 + $0x1c] sm:$0xf]
    %v122 = vld [vmem:[#allocation5 + $0x20] sm:$0xf]
    %v123 = vld [vmem:[#allocation5 + $0x24] sm:$0xf]
    %v124 = vld [vmem:[#allocation5 + $0x28] sm:$0xf]
    %v125 = vld [vmem:[#allocation5 + $0x2c] sm:$0xf]
    %v126 = vld [vmem:[#allocation5 + $0x30] sm:$0xf]
    %v127 = vld [vmem:[#allocation5 + $0x34] sm:$0xf]
    %v128 = vld [vmem:[#allocation5 + $0x38] sm:$0xf]
    %v129 = vld [vmem:[#allocation5 + $0x3c] sm:$0xf]
    %v130 = vld [vmem:[%s4] sm:$0x1]
    %v132 = vlaneseq
    %v133 = vshrl.u32 %v132, 7
    %v134 = vsub.s32 0, %v133
    %v135 = vrot.slane %v130, %v134
    %v153 = vunpack.c.l.b16 %v114
    %v154 = vunpack.c.l.b16 %v115
    %v155 = vunpack.c.l.b16 %v116
    %v156 = vunpack.c.l.b16 %v117
    %v157 = vunpack.c.l.b16 %v118
    %v158 = vunpack.c.l.b16 %v119
    %v159 = vunpack.c.l.b16 %v120
    %v160 = vunpack.c.l.b16 %v121
    %v161 = vunpack.c.l.b16 %v122
    %v162 = vunpack.c.l.b16 %v123
    %v163 = vunpack.c.l.b16 %v124
    %v164 = vunpack.c.l.b16 %v125
    %v165 = vunpack.c.l.b16 %v126
    %v166 = vunpack.c.l.b16 %v127
    %v167 = vunpack.c.l.b16 %v128
    %v168 = vunpack.c.l.b16 %v129
    %v169 = vpack.c.b16 %v154, %v153
    %v170 = vpack.c.b16 %v156, %v155
    %v171 = vpack.c.b16 %v158, %v157
    %v172 = vpack.c.b16 %v160, %v159
    %v173 = vpack.c.b16 %v162, %v161
    %v174 = vpack.c.b16 %v164, %v163
    %v175 = vpack.c.b16 %v166, %v165
    %v176 = vpack.c.b16 %v168, %v167
    %185 = vmatprep.subr.bf16.mxu0 0
    %186 = vmatpush1.bf16.msra.mxu0 %v169
    %187 = vmatprep.subr.bf16.mxu0 0
    %188 = vmatpush1.bf16.msra.mxu0 %v170
    %189 = vmatprep.subr.bf16.mxu0 0
    %190 = vmatpush1.bf16.msra.mxu0 %v171
    %191 = vmatprep.subr.bf16.mxu0 0
    %192 = vmatpush1.bf16.msra.mxu0 %v172
    %193 = vmatprep.subr.bf16.mxu0 0
    %194 = vmatpush1.bf16.msra.mxu0 %v173
    %195 = vmatprep.subr.bf16.mxu0 0
    %196 = vmatpush1.bf16.msra.mxu0 %v174
    %197 = vmatprep.subr.bf16.mxu0 0
    %198 = vmatpush1.bf16.msra.mxu0 %v175
    %199 = vmatprep.subr.bf16.mxu0 0
    %200 = vmatpush1.bf16.msra.mxu0 %v176
    %201 = vmatprep.subr.bf16.mxu0 0
    %202 = vmatpush1.bf16.msra.mxu0 0
    %203 = vmatprep.subr.bf16.mxu0 0
    %204 = vmatpush1.bf16.msra.mxu0 0
    %205 = vmatprep.subr.bf16.mxu0 0
    %206 = vmatpush1.bf16.msra.mxu0 0
    %207 = vmatprep.subr.bf16.mxu0 0
    %208 = vmatpush1.bf16.msra.mxu0 0
    %209 = vmatprep.subr.bf16.mxu0 0
    %210 = vmatpush1.bf16.msra.mxu0 0
    %211 = vmatprep.subr.bf16.mxu0 0
    %212 = vmatpush1.bf16.msra.mxu0 0
    %213 = vmatprep.subr.bf16.mxu0 0
    %214 = vmatpush1.bf16.msra.mxu0 0
    %215 = vmatprep.subr.bf16.mxu0 0
    %216 = vmatpush1.bf16.msra.mxu0 0
    %217 = vmatprep.mubr.bf16.mxu0 0
    %218 = vmatmul.mubr.bf16.gmra.mrb[0].mxu0 %v113
    %v219 = vpop.f32.mrb[0].mxu0
    %v220 = vadd.f32 %v135, %v219
    %v221 = vpop.f32.mrb[0].mxu0
    %v222 = vpop.f32.mrb[0].mxu0
    %v223 = vadd.f32 %v135, %v222
    %v224 = vpop.f32.mrb[0].mxu0
    %225 = vdwg.mxu0
    %v226 = vadd.f32 %v50, %v220
    %v227 = vadd.f32 %v51, %v223
    %228 = vst [vmem:[#allocation7] sm:$0xff] %v226
    %229 = vst [vmem:[#allocation7 + $0x8] sm:$0xff] %v227
    // Predicated region
    $region30: #{tpu_custom_call.1} parent=1 // pred_check
      _
    $region31: #{tpu_custom_call.1} parent=1 // pred_check_branch
      %231 = sbr.rel (0) target = $region33
    $region32: #{tpu_custom_call.1} parent=1 // pred_region
      %s233 = ssub.s32 256, 256
      %234 = vsyncadd [#allocation4], %s233
      %s235 = sshll.u32 [#allocation7], 4
      %s236 = int_to_ptr.vmem [resolvable:$true] %s235
      %241 = dma.vmem_to_hbm [thread:$0]  %s236, 256, %s5, [#allocation4], 128, 128, 8
    $region33: #{tpu_custom_call.1} parent=1 // pred_fallthru
      _
    // Predicated region
    $region34: #{tpu_custom_call.1} parent=1 // pred_check
      _
    $region35: #{tpu_custom_call.1} parent=1 // pred_check_branch
      %243 = sbr.rel (0) target = $region37
    $region36: #{tpu_custom_call.1} parent=1 // pred_region
      %244 = dma.done [#allocation4], 256
    $region37: #{tpu_custom_call.1} parent=1 // pred_fallthru
      _
    %245 = vsyncpa [#allocation3], 1
    %246 = vsyncpa [#allocation6], 1
    %247 = vsyncpa [#allocation4], 1

// kernel: tpu_custom_call.1
$region0: #{tpu_custom_call.1}
  #allocation0 [shape = 'u32[]', space=smem, size = 0x4, offset = 0x4, fixed_abs, tag = 'smem constant byte address 0x4 - core index']
  #allocation1 [shape = 'u32[144,128]{1,0:T(1,128)}', space=vmem, size = 0x12000, scoped, tag = 'internal scratch']
  %s0 = inlined_call_operand.hbm [shape: f32[16,128], index: 0, kind: input, shape index: {}]
  %s1 = inlined_call_operand.vmem [shape: f32[1,128], index: 1, kind: input, shape index: {}]
  %s2 = inlined_call_operand.vmem [shape: f32[1,128], index: 2, kind: input, shape index: {}]
  %s3 = inlined_call_operand.hbm [shape: bf16[128,128], index: 3, kind: input, shape index: {}]
  %s4 = inlined_call_operand.vmem [shape: f32[1,128], index: 4, kind: input, shape index: {}]
  %s5 = inlined_call_operand.hbm [shape: f32[16,128], index: 5, kind: output, shape index: {}]
  %s6 = sld [smem:[#allocation0]]
  $region38: #{tpu_custom_call.1} parent=0
    _
  %s8 = ssub.s32 1, %s6
  %s9 = scalar_select 0, %s8, %s6
  $region1: #{tpu_custom_call.1} parent=0
    #allocation2 [shape = 'u8[8192]{0}', space=vmem, size = 0x2000, scoped, tag = 'input window, operand 0, single buffered']
    #allocation3 [shape = 's32[1]{0}', space=sflag, size = 0x4, scoped, tag = 'scoped memory for tpu_custom_call.1']
    #allocation4 [shape = 's32[1]{0}', space=sflag, size = 0x4, scoped, tag = 'scoped memory for tpu_custom_call.1']
    #allocation5 [shape = 'u8[32768]{0}', space=vmem, size = 0x8000, scoped, tag = 'input window, operand 3, single buffered']
    #allocation6 [shape = 's32[1]{0}', space=sflag, size = 0x4, scoped, tag = 'scoped memory for tpu_custom_call.1']
    #allocation7 [shape = 'u8[8192]{0}', space=vmem, size = 0x2000, scoped, tag = 'output window, operand 0, single buffered']
    %10 = vsyncpa [#allocation3], 0
    %11 = vsyncpa [#allocation6], 0
    %12 = vsyncpa [#allocation4], 0
    // Predicated region
    $region2: #{tpu_custom_call.1} parent=1 // pred_check
      _
    $region3: #{tpu_custom_call.1} parent=1 // pred_check_branch
      %14 = sbr.rel (0) target = $region5
    $region4: #{tpu_custom_call.1} parent=1 // pred_region
      %s16 = ssub.s32 256, 256
      %17 = vsyncadd [#allocation3], %s16
      %s18 = sshll.u32 [#allocation2], 4
      %s19 = int_to_ptr.vmem [resolvable:$true] %s18
      %24 = dma.hbm_to_vmem [thread:$0]  %s0, 256, %s19, [#allocation3], 128, 128, 8
    $region5: #{tpu_custom_call.1} parent=1 // pred_fallthru
      _
    // Predicated region
    $region6: #{tpu_custom_call.1} parent=1 // pred_check
      _
    $region7: #{tpu_custom_call.1} parent=1 // pred_check_branch
      %26 = sbr.rel (0) target = $region9
    $region8: #{tpu_custom_call.1} parent=1 // pred_region
      _
    $region9: #{tpu_custom_call.1} parent=1 // pred_fallthru
      _
    // Predicated region
    $region10: #{tpu_custom_call.1} parent=1 // pred_check
      _
    $region11: #{tpu_custom_call.1} parent=1 // pred_check_branch
      %28 = sbr.rel (0) target = $region13
    $region12: #{tpu_custom_call.1} parent=1 // pred_region
      _
    $region13: #{tpu_custom_call.1} parent=1 // pred_fallthru
      _
    // Predicated region
    $region14: #{tpu_custom_call.1} parent=1 // pred_check
      _
    $region15: #{tpu_custom_call.1} parent=1 // pred_check_branch
      %30 = sbr.rel (0) target = $region17
    $region16: #{tpu_custom_call.1} parent=1 // pred_region
      %s32 = ssub.s32 1024, 1024
      %33 = vsyncadd [#allocation6], %s32
      %s34 = sshll.u32 [#allocation5], 4
      %s35 = int_to_ptr.vmem [resolvable:$true] %s34
      %40 = dma.hbm_to_vmem [thread:$0]  %s3, 1024, %s35, [#allocation6], 64, 64, 4
    $region17: #{tpu_custom_call.1} parent=1 // pred_fallthru
      _
    // Predicated region
    $region18: #{tpu_custom_call.1} parent=1 // pred_check
      _
    $region19: #{tpu_custom_call.1} parent=1 // pred_check_branch
      %42 = sbr.rel (0) target = $region21
    $region20: #{tpu_custom_call.1} parent=1 // pred_region
      _
    $region21: #{tpu_custom_call.1} parent=1 // pred_fallthru
      _
    // Predicated region
    $region22: #{tpu_custom_call.1} parent=1 // pred_check
      _
    $region23: #{tpu_custom_call.1} parent=1 // pred_check_branch
      %44 = sbr.rel (0) target = $region25
    $region24: #{tpu_custom_call.1} parent=1 // pred_region
      %45 = dma.done [#allocation3], 256
    $region25: #{tpu_custom_call.1} parent=1 // pred_fallthru
      _
    // Predicated region
    $region26: #{tpu_custom_call.1} parent=1 // pred_check
      _
    $region27: #{tpu_custom_call.1} parent=1 // pred_check_branch
      %47 = sbr.rel (0) target = $region29
    $region28: #{tpu_custom_call.1} parent=1 // pred_region
      %48 = dma.done [#allocation6], 1024
    $region29: #{tpu_custom_call.1} parent=1 // pred_fallthru
      _
    %v50 = vld [vmem:[#allocation2] sm:$0xff]
    %v51 = vld [vmem:[#allocation2 + $0x8] sm:$0xff]
    %52 = vadd.xlane.f32.xlu0 %v50
    %v53 = vpop.xlane.xlu0 %52
    %54 = vadd.xlane.f32.xlu0 %v51
    %v55 = vpop.xlane.xlu0 %54
    %v56 = vmul.f32 %v53, 0.03125
    %v57 = vmul.f32 %v55, 0.03125
    %v58 = vsub.f32 %v50, %v56
    %v59 = vsub.f32 %v51, %v57
    %v60 = vlaneseq
    %v61 = vand.u32 %v60, 127
    %vm62 = vcmp.lt.s32.totalorder %v61, 32
    %v63 = vsel %vm62, 1, 0
    %vm64 = vcmp.eq.s32.totalorder %v63, 1
    %v65 = vsel %vm64, %v58, 0.0
    %v66 = vsel %vm64, %v59, 0.0
    %v67 = vmul.f32 %v65, %v65
    %v68 = vmul.f32 %v66, %v66
    %69 = vadd.xlane.f32.xlu0 %v67
    %v70 = vpop.xlane.xlu0 %69
    %71 = vadd.xlane.f32.xlu0 %v68
    %v72 = vpop.xlane.xlu0 %71
    %v73 = vmul.f32 %v70, 0.032258064
    %v74 = vmul.f32 %v72, 0.032258064
    %v75 = vrsqrt.pop %v73
    %v76 = vmul.f32 %v73, %v75
    %vm77 = vcmp.eq.f32.partialorder %v73, inf
    %v78 = vsel %vm77, %v73, %v76
    %vm79 = vcmp.eq.f32.partialorder %v73, 0.0
    %v80 = vand.u32 %v73, 2147483648
    %v81 = vsel %vm79, %v80, %v78
    %v82 = vrsqrt.pop %v74
    %v83 = vmul.f32 %v74, %v82
    %vm84 = vcmp.eq.f32.partialorder %v74, inf
    %v85 = vsel %vm84, %v74, %v83
    %vm86 = vcmp.eq.f32.partialorder %v74, 0.0
    %v87 = vand.u32 %v74, 2147483648
    %v88 = vsel %vm86, %v87, %v85
    %v89 = vadd.f32 %v81, 1e-06
    %v90 = vadd.f32 %v88, 1e-06
    %v91 = vrcp.pop %v89
    %v92 = vrcp.pop %v90
    %v93 = vld [vmem:[%s1] sm:$0x1]
    %v95 = vlaneseq
    %v96 = vshrl.u32 %v95, 7
    %v97 = vsub.s32 0, %v96
    %v98 = vrot.slane %v93, %v97
    %v100 = vmul.f32 %v98, %v65
    %v101 = vmul.f32 %v98, %v66
    %v102 = vmul.f32 %v100, %v91
    %v103 = vmul.f32 %v101, %v92
    %v104 = vld [vmem:[%s2] sm:$0x1]
    %v106 = vlaneseq
    %v107 = vshrl.u32 %v106, 7
    %v108 = vsub.s32 0, %v107
    %v109 = vrot.slane %v104, %v108
    %v111 = vadd.f32 %v102, %v109
    %v112 = vadd.f32 %v103, %v109
    %v113 = vpack.c.bf16 %v112, %v111
    %v114 = vld [vmem:[#allocation5] sm:$0xf]
    %v115 = vld [vmem:[#allocation5 + $0x4] sm:$0xf]
    %v116 = vld [vmem:[#allocation5 + $0x8] sm:$0xf]
    %v117 = vld [vmem:[#allocation5 + $0xc] sm:$0xf]
    %v118 = vld [vmem:[#allocation5 + $0x10] sm:$0xf]
    %v119 = vld [vmem:[#allocation5 + $0x14] sm:$0xf]
    %v120 = vld [vmem:[#allocation5 + $0x18] sm:$0xf]
    %v121 = vld [vmem:[#allocation5 + $0x1c] sm:$0xf]
    %v122 = vld [vmem:[#allocation5 + $0x20] sm:$0xf]
    %v123 = vld [vmem:[#allocation5 + $0x24] sm:$0xf]
    %v124 = vld [vmem:[#allocation5 + $0x28] sm:$0xf]
    %v125 = vld [vmem:[#allocation5 + $0x2c] sm:$0xf]
    %v126 = vld [vmem:[#allocation5 + $0x30] sm:$0xf]
    %v127 = vld [vmem:[#allocation5 + $0x34] sm:$0xf]
    %v128 = vld [vmem:[#allocation5 + $0x38] sm:$0xf]
    %v129 = vld [vmem:[#allocation5 + $0x3c] sm:$0xf]
    %v130 = vld [vmem:[%s4] sm:$0x1]
    %v132 = vlaneseq
    %v133 = vshrl.u32 %v132, 7
    %v134 = vsub.s32 0, %v133
    %v135 = vrot.slane %v130, %v134
    %v153 = vunpack.c.l.b16 %v114
    %v154 = vunpack.c.l.b16 %v115
    %v155 = vunpack.c.l.b16 %v116
    %v156 = vunpack.c.l.b16 %v117
    %v157 = vunpack.c.l.b16 %v118
    %v158 = vunpack.c.l.b16 %v119
    %v159 = vunpack.c.l.b16 %v120
    %v160 = vunpack.c.l.b16 %v121
    %v161 = vunpack.c.l.b16 %v122
    %v162 = vunpack.c.l.b16 %v123
    %v163 = vunpack.c.l.b16 %v124
    %v164 = vunpack.c.l.b16 %v125
    %v165 = vunpack.c.l.b16 %v126
    %v166 = vunpack.c.l.b16 %v127
    %v167 = vunpack.c.l.b16 %v128
    %v168 = vunpack.c.l.b16 %v129
    %v169 = vpack.c.b16 %v154, %v153
    %v170 = vpack.c.b16 %v156, %v155
    %v171 = vpack.c.b16 %v158, %v157
    %v172 = vpack.c.b16 %v160, %v159
    %v173 = vpack.c.b16 %v162, %v161
    %v174 = vpack.c.b16 %v164, %v163
    %v175 = vpack.c.b16 %v166, %v165
    %v176 = vpack.c.b16 %v168, %v167
    %185 = vmatprep.subr.bf16.mxu0 0
    %186 = vmatpush1.bf16.msra.mxu0 %v169
    %187 = vmatprep.subr.bf16.mxu0 0
    %188 = vmatpush1.bf16.msra.mxu0 %v170
    %189 = vmatprep.subr.bf16.mxu0 0
    %190 = vmatpush1.bf16.msra.mxu0 %v171
    %191 = vmatprep.subr.bf16.mxu0 0
    %192 = vmatpush1.bf16.msra.mxu0 %v172
    %193 = vmatprep.subr.bf16.mxu0 0
    %194 = vmatpush1.bf16.msra.mxu0 %v173
    %195 = vmatprep.subr.bf16.mxu0 0
    %196 = vmatpush1.bf16.msra.mxu0 %v174
    %197 = vmatprep.subr.bf16.mxu0 0
    %198 = vmatpush1.bf16.msra.mxu0 %v175
    %199 = vmatprep.subr.bf16.mxu0 0
    %200 = vmatpush1.bf16.msra.mxu0 %v176
    %201 = vmatprep.subr.bf16.mxu0 0
    %202 = vmatpush1.bf16.msra.mxu0 0
    %203 = vmatprep.subr.bf16.mxu0 0
    %204 = vmatpush1.bf16.msra.mxu0 0
    %205 = vmatprep.subr.bf16.mxu0 0
    %206 = vmatpush1.bf16.msra.mxu0 0
    %207 = vmatprep.subr.bf16.mxu0 0
    %208 = vmatpush1.bf16.msra.mxu0 0
    %209 = vmatprep.subr.bf16.mxu0 0
    %210 = vmatpush1.bf16.msra.mxu0 0
    %211 = vmatprep.subr.bf16.mxu0 0
    %212 = vmatpush1.bf16.msra.mxu0 0
    %213 = vmatprep.subr.bf16.mxu0 0
    %214 = vmatpush1.bf16.msra.mxu0 0
    %215 = vmatprep.subr.bf16.mxu0 0
    %216 = vmatpush1.bf16.msra.mxu0 0
    %217 = vmatprep.mubr.bf16.mxu0 0
    %218 = vmatmul.mubr.bf16.gmra.mrb[0].mxu0 %v113
    %v219 = vpop.f32.mrb[0].mxu0
    %v220 = vadd.f32 %v135, %v219
    %v221 = vpop.f32.mrb[0].mxu0
    %v222 = vpop.f32.mrb[0].mxu0
    %v223 = vadd.f32 %v135, %v222
    %v224 = vpop.f32.mrb[0].mxu0
    %225 = vdwg.mxu0
    %v226 = vadd.f32 %v50, %v220
    %v227 = vadd.f32 %v51, %v223
    %228 = vst [vmem:[#allocation7] sm:$0xff] %v226
    %229 = vst [vmem:[#allocation7 + $0x8] sm:$0xff] %v227
    // Predicated region
    $region30: #{tpu_custom_call.1} parent=1 // pred_check
      _
    $region31: #{tpu_custom_call.1} parent=1 // pred_check_branch
      %231 = sbr.rel (0) target = $region33
    $region32: #{tpu_custom_call.1} parent=1 // pred_region
      %s233 = ssub.s32 256, 256
      %234 = vsyncadd [#allocation4], %s233
      %s235 = sshll.u32 [#allocation7], 4
      %s236 = int_to_ptr.vmem [resolvable:$true] %s235
      %241 = dma.vmem_to_hbm [thread:$0]  %s236, 256, %s5, [#allocation4], 128, 128, 8
    $region33: #{tpu_custom_call.1} parent=1 // pred_fallthru
      _
    // Predicated region
    $region34: #{tpu_custom_call.1} parent=1 // pred_check
      _
    $region35: #{tpu_custom_call.1} parent=1 // pred_check_branch
      %243 = sbr.rel (0) target = $region37
    $region36: #{tpu_custom_call.1} parent=1 // pred_region
      %244 = dma.done [#allocation4], 256
    $region37: #{tpu_custom_call.1} parent=1 // pred_fallthru
      _
    %245 = vsyncpa [#allocation3], 1
    %246 = vsyncpa [#allocation6], 1
    %247 = vsyncpa [#allocation4], 1

</llo_original>
